<compile_context>
chip_gen: v6e
topology: v6e:2x2x1
jax: 0.10.0
libtpu: 0.0.40
codegen_flags: <defaults>
</compile_context>

<pallas_src>
import math
import functools

import jax
import jax.numpy as jnp
import numpy as np
from jax.experimental import pallas as pl
from jax.experimental.pallas import tpu as pltpu


def _modconv_kernel(x_ref, mod_ref, w_ref, o_ref, pad_ref, *,
                    H, W, k, block_b, left):
    """One grid step = `block_b` samples of a k x k 'same' modulated conv.

    x_ref:   (block_b, Cin, H*W)       flattened NCHW input (lane dim = H*W)
    mod_ref: (block_b, 1, Cin)         per-sample modulation (already * scale)
    w_ref:   (k*k, Cout, Cin)          conv taps, demodulation pre-folded
    o_ref:   (block_b, Cout, H*W)      flattened NCHW output (lane-dense)
    pad_ref: (Cin, left + H*W + right) scratch: zero halo | image | zero halo
    """
    HW = H * W
    pad = k // 2
    Cin = x_ref.shape[1]
    Cout = o_ref.shape[1]
    right = pad_ref.shape[1] - left - HW

    # Zero the halo strips once per grid step.  The interior is overwritten per
    # sample below, so the strips stay zero for every sample of the block.
    pad_ref[:, :left] = jnp.zeros((Cin, left), pad_ref.dtype)
    pad_ref[:, left + HW:left + HW + right] = jnp.zeros((Cin, right),
                                                        pad_ref.dtype)

    # Column-validity masks: tap (., dx) reads outside the image when the
    # output column w has w + dx - pad outside [0, W).  Row overflow is handled
    # by the zero halos.  Built once per grid step on the VPU.
    col = jax.lax.broadcasted_iota(jnp.int32, (1, HW), 1)
    wc = col % W                                   # output column per flat idx
    col_masks = [(wc >= (pad - dx)) & (wc < (W + pad - dx)) for dx in range(k)]

    for bi in range(block_b):
        # Copy this sample's flat image into the scratch interior (replaces the
        # HBM-level jnp.pad of the previous version).  `left` is 128-aligned.
        pad_ref[:, left:left + HW] = x_ref[bi]

        # Fold the per-sample modulation into the (tiny) tap weights instead of
        # scaling the full feature map: w'[t, co, ci] = w[t, co, ci] * mod[ci].
        w_all = w_ref[...] * mod_ref[bi]           # (k*k, Cout, Cin)

        acc = jnp.zeros((Cout, HW), jnp.float32)
        for dy in range(k):
            for dx in range(k):
                s = (dy - pad) * W + (dx - pad)    # flat spatial shift
                patch = pad_ref[:, left + s:left + s + HW]      # (Cin, HW)
                if dx != pad:                      # center column: all valid
                    patch = jnp.where(col_masks[dx], patch, 0.0)
                acc = acc + jnp.dot(w_all[dy * k + dx], patch,
                                    preferred_element_type=jnp.float32)

        o_ref[bi] = acc.astype(o_ref.dtype)        # lane-dense store


def modulated_conv2d(x, style, weight, w_mod, b_mod, style_inv,
                     demodulate=True, block_b=1):
    """x: (B, Cin, H, W) NCHW, style: (B, style_dim).  Returns (B, Cout, H, W)."""
    B, Cin, H, W = x.shape
    Cout, _, k, _ = weight.shape
    assert k % 2 == 1, "padding=k//2 only gives 'same' output for odd k"
    assert B % block_b == 0
    pad = k // 2
    HW = H * W
    scale = 1.0 / math.sqrt(Cin * k * k)

    # --- parameter-sized glue (constant-folded in a real model) -------------
    # modulation = scale * Linear(style)                       -> (B, Cin)
    mod = scale * (style @ w_mod.T + b_mod)
    if demodulate:
        # demod depends only on parameters (weight, style_inv buffer).
        demod = jax.lax.rsqrt(
            jnp.sum((scale * style_inv * weight[None]) ** 2, axis=(2, 3, 4))
            + 1e-8)[0]                                          # (Cout,)
    else:
        demod = jnp.ones((Cout,), x.dtype)
    # Fold demodulation into the weight and lay it out as per-tap (Cout, Cin).
    w_base = jnp.transpose(weight * demod[:, None, None, None],
                           (2, 3, 0, 1)).reshape(k * k, Cout, Cin).astype(x.dtype)

    x_flat = x.reshape(B, Cin, HW)                  # contiguous reshape (free)
    mod3 = mod[:, None, :].astype(x.dtype)          # (B, 1, Cin)

    # Flat padded-scratch geometry:  | left zeros | image (H*W) | right zeros |
    smax = pad * (W + 1)                            # largest |flat shift|
    left = ((smax + 127) // 128) * 128              # aligned interior copy
    right = left

    cost = pl.CostEstimate(
        flops=2 * B * HW * k * k * Cin * Cout,
        transcendentals=0,
        bytes_accessed=(x_flat.size + w_base.size + mod3.size + B * Cout * HW)
        * x.dtype.itemsize)

    out_flat = pl.pallas_call(
        functools.partial(_modconv_kernel, H=H, W=W, k=k,
                          block_b=block_b, left=left),
        out_shape=jax.ShapeDtypeStruct((B, Cout, HW), x.dtype),
        grid=(B // block_b,),
        in_specs=[
            pl.BlockSpec((block_b, Cin, HW), lambda b: (b, 0, 0)),
            pl.BlockSpec((block_b, 1, Cin), lambda b: (b, 0, 0)),
            pl.BlockSpec((k * k, Cout, Cin), lambda b: (0, 0, 0)),
        ],
        out_specs=pl.BlockSpec((block_b, Cout, HW), lambda b: (b, 0, 0)),
        scratch_shapes=[pltpu.VMEM((Cin, left + HW + right), x.dtype)],
        compiler_params=pltpu.CompilerParams(
            dimension_semantics=("parallel",)),    # megacore-shardable batch
        cost_estimate=cost,
    )(x_flat, mod3, w_base)

    return out_flat.reshape(B, Cout, H, W)          # contiguous reshape (free)


def reference_forward(x, style, weight, w_mod, b_mod, style_inv,
                      demodulate=True):
    """Pure-JAX reference mirroring the PyTorch forward (NCHW)."""
    Cout, Cin, k, _ = weight.shape
    scale = 1.0 / math.sqrt(Cin * k * k)
    mod = scale * (style @ w_mod.T + b_mod)                      # (B, Cin)
    xm = x * mod[:, :, None, None]
    out = jax.lax.conv_general_dilated(
        xm, weight, window_strides=(1, 1), padding="SAME",
        dimension_numbers=("NCHW", "OIHW", "NCHW"))
    if demodulate:
        demod = jax.lax.rsqrt(
            jnp.sum((scale * style_inv * weight[None]) ** 2, axis=(2, 3, 4))
            + 1e-8)                                              # (1, Cout)
        out = out * demod[:, :, None, None]
    return out


if __name__ == "__main__":
    # Module config (synthetic, deterministic init)
    B, Cin, Cout, style_dim, k, H, W = 2, 4, 8, 8, 3, 16, 16

    key = jax.random.PRNGKey(0)
    k1, k2, k3, k4, k5 = jax.random.split(key, 5)

    # Parameters (shapes match the PyTorch module __init__)
    weight = jax.random.normal(k1, (Cout, Cin, k, k), jnp.float32)      # conv weight
    w_mod = jax.random.normal(k2, (Cin, style_dim), jnp.float32) * 0.1  # Linear weight
    b_mod = jnp.ones((Cin,), jnp.float32)                               # bias filled 1.0
    style_inv = jax.random.normal(k3, (1, 1, Cin, 1, 1), jnp.float32)   # buffer

    # Inputs
    x = jax.random.normal(k4, (B, Cin, H, W), jnp.float32)
    style = jax.random.normal(k5, (B, style_dim), jnp.float32)

    ref = reference_forward(x, style, weight, w_mod, b_mod, style_inv,
                            demodulate=True)

    # One sample per grid step (batch axis sharded across cores on v7x).
    out = modulated_conv2d(x, style, weight, w_mod, b_mod, style_inv,
                           demodulate=True, block_b=1)
    out = jax.block_until_ready(out)
    np.testing.assert_allclose(np.asarray(out), np.asarray(ref),
                               rtol=2e-5, atol=2e-5)

    # Two samples per grid step (amortizes per-grid-step pipeline overhead).
    out2 = modulated_conv2d(x, style, weight, w_mod, b_mod, style_inv,
                            demodulate=True, block_b=2)
    out2 = jax.block_until_ready(out2)
    np.testing.assert_allclose(np.asarray(out2), np.asarray(ref),
                               rtol=2e-5, atol=2e-5)

    print("KERNEL_OK")
</pallas_src>

<mosaic_0001>
module attributes {stable_mosaic.version = 11 : i64} {
  func.func @_modconv_kernel(%arg0: i32, %arg1: memref<1x4x256xf32, #tpu.memory_space<vmem>>, %arg2: memref<1x1x4xf32, #tpu.memory_space<vmem>>, %arg3: memref<9x8x4xf32, #tpu.memory_space<vmem>>, %arg4: memref<1x8x256xf32, #tpu.memory_space<vmem>>, %arg5: memref<4x512xf32, #tpu.memory_space<vmem>>) attributes {dimension_semantics = [#tpu.dimension_semantics<parallel>], iteration_bounds = array<i64: 2>, scalar_prefetch = 0 : i64, scratch_operands = 1 : i64, tpu.core_type = #tpu.core_type<tc>, window_params = [{transform_indices = @transform_0, window_bounds = array<i64: 1, 4, 256>}, {transform_indices = @transform_1, window_bounds = array<i64: 1, 1, 4>}, {pipeline_mode = #tpu.pipeline_mode<synchronous>, transform_indices = @transform_2, window_bounds = array<i64: 9, 8, 4>}, {transform_indices = @transform_3, window_bounds = array<i64: 1, 8, 256>}]} {
    %cst = arith.constant 0.000000e+00 : f32
    %0 = vector.broadcast %cst : f32 to vector<4x128xf32>
    %c0 = arith.constant 0 : index
    %c0_0 = arith.constant 0 : index
    %1 = vector.load %arg5[%c0, %c0_0] : memref<4x512xf32, #tpu.memory_space<vmem>>, vector<4x128xf32>
    tpu.vector_store %arg5[%c0, %c0_0], %0 {strides = array<i32>} : memref<4x512xf32, #tpu.memory_space<vmem>>, vector<4x128xf32>,
    %cst_1 = arith.constant 0.000000e+00 : f32
    %2 = vector.broadcast %cst_1 : f32 to vector<4x128xf32>
    %c0_2 = arith.constant 0 : index
    %c384 = arith.constant 384 : index
    %3 = vector.load %arg5[%c0_2, %c384] : memref<4x512xf32, #tpu.memory_space<vmem>>, vector<4x128xf32>
    tpu.vector_store %arg5[%c0_2, %c384], %2 {strides = array<i32>} : memref<4x512xf32, #tpu.memory_space<vmem>>, vector<4x128xf32>,
    %4 = tpu.iota {dimensions = array<i32: 1>} : vector<1x256xi32>
    %c16_i32 = arith.constant 16 : i32
    %c0_i32 = arith.constant 0 : i32
    %5 = arith.cmpi eq, %c16_i32, %c0_i32 : i32
    %c1_i32 = arith.constant 1 : i32
    %6 = arith.select %5, %c1_i32, %c16_i32 : i32
    %7 = vector.broadcast %6 : i32 to vector<1x256xi32>
    %8 = arith.remsi %4, %7 : vector<1x256xi32>
    %c0_i32_3 = arith.constant 0 : i32
    %9 = vector.broadcast %c0_i32_3 : i32 to vector<1x256xi32>
    %10 = arith.cmpi ne, %8, %9 : vector<1x256xi32>
    %c0_i32_4 = arith.constant 0 : i32
    %11 = vector.broadcast %c0_i32_4 : i32 to vector<1x256xi32>
    %12 = arith.cmpi slt, %8, %11 : vector<1x256xi32>
    %c0_i32_5 = arith.constant 0 : i32
    %13 = arith.cmpi slt, %6, %c0_i32_5 : i32
    %14 = vector.broadcast %13 : i1 to vector<1x256xi1>
    %15 = vector.broadcast %14 : vector<1x256xi1> to vector<1x256xi1>
    %16 = arith.xori %12, %15 : vector<1x256xi1>
    %17 = arith.andi %16, %10 : vector<1x256xi1>
    %18 = vector.broadcast %6 : i32 to vector<1x256xi32>
    %19 = arith.addi %8, %18 : vector<1x256xi32>
    %20 = arith.select %17, %19, %8 : vector<1x256xi1>, vector<1x256xi32>
    %c1_i32_6 = arith.constant 1 : i32
    %21 = vector.broadcast %c1_i32_6 : i32 to vector<1x256xi32>
    %22 = arith.cmpi sge, %20, %21 : vector<1x256xi32>
    %c17_i32 = arith.constant 17 : i32
    %23 = vector.broadcast %c17_i32 : i32 to vector<1x256xi32>
    %24 = arith.cmpi slt, %20, %23 : vector<1x256xi32>
    %25 = arith.andi %22, %24 : vector<1x256xi1>
    %c-1_i32 = arith.constant -1 : i32
    %26 = vector.broadcast %c-1_i32 : i32 to vector<1x256xi32>
    %27 = arith.cmpi sge, %20, %26 : vector<1x256xi32>
    %c15_i32 = arith.constant 15 : i32
    %28 = vector.broadcast %c15_i32 : i32 to vector<1x256xi32>
    %29 = arith.cmpi slt, %20, %28 : vector<1x256xi32>
    %30 = arith.andi %27, %29 : vector<1x256xi1>
    %c0_7 = arith.constant 0 : index
    %c0_8 = arith.constant 0 : index
    %c0_9 = arith.constant 0 : index
    %31 = vector.load %arg1[%c0_7, %c0_8, %c0_9] : memref<1x4x256xf32, #tpu.memory_space<vmem>>, vector<1x4x256xf32>
    %32 = vector.shape_cast %31 : vector<1x4x256xf32> to vector<4x256xf32>
    %c0_10 = arith.constant 0 : index
    %c128 = arith.constant 128 : index
    %33 = vector.load %arg5[%c0_10, %c128] : memref<4x512xf32, #tpu.memory_space<vmem>>, vector<4x256xf32>
    tpu.vector_store %arg5[%c0_10, %c128], %32 {strides = array<i32>} : memref<4x512xf32, #tpu.memory_space<vmem>>, vector<4x256xf32>,
    %c0_11 = arith.constant 0 : index
    %c0_12 = arith.constant 0 : index
    %c0_13 = arith.constant 0 : index
    %34 = vector.load %arg3[%c0_11, %c0_12, %c0_13] : memref<9x8x4xf32, #tpu.memory_space<vmem>>, vector<9x8x4xf32>
    %c0_14 = arith.constant 0 : index
    %c0_15 = arith.constant 0 : index
    %c0_16 = arith.constant 0 : index
    %35 = vector.load %arg2[%c0_14, %c0_15, %c0_16] : memref<1x1x4xf32, #tpu.memory_space<vmem>>, vector<1x1x4xf32>
    %36 = vector.shape_cast %35 : vector<1x1x4xf32> to vector<1x4xf32>
    %37 = vector.shape_cast %36 : vector<1x4xf32> to vector<1x1x4xf32>
    %38 = vector.broadcast %37 : vector<1x1x4xf32> to vector<9x8x4xf32>
    %39 = arith.mulf %34, %38 : vector<9x8x4xf32>
    %cst_17 = arith.constant 0.000000e+00 : f32
    %40 = vector.broadcast %cst_17 : f32 to vector<8x256xf32>
    %c0_18 = arith.constant 0 : index
    %c111 = arith.constant 111 : index
    %41 = vector.load %arg5[%c0_18, %c111] : memref<4x512xf32, #tpu.memory_space<vmem>>, vector<4x256xf32>
    %cst_19 = arith.constant 0.000000e+00 : f32
    %42 = vector.shape_cast %25 : vector<1x256xi1> to vector<1x256xi1>
    %43 = vector.broadcast %42 : vector<1x256xi1> to vector<4x256xi1>
    %44 = vector.broadcast %cst_19 : f32 to vector<4x256xf32>
    %45 = arith.select %43, %41, %44 : vector<4x256xi1>, vector<4x256xf32>
    %46 = vector.extract_strided_slice %39 {offsets = [0, 0, 0], sizes = [1, 8, 4], strides = [1, 1, 1]} : vector<9x8x4xf32> to vector<1x8x4xf32>
    %47 = vector.shape_cast %46 : vector<1x8x4xf32> to vector<8x4xf32>
    %cst_20 = arith.constant dense<0.000000e+00> : vector<8x256xf32>
    %48 = tpu.matmul %47, %45, %cst_20 {dimension_numbers = #tpu.dot_dimension_numbers<[1], [0], [0], [1], [0, 0, 1, 1], [], []>} : vector<8x4xf32>, vector<4x256xf32>, vector<8x256xf32> -> vector<8x256xf32>
    %49 = arith.addf %40, %48 : vector<8x256xf32>
    %c0_21 = arith.constant 0 : index
    %c112 = arith.constant 112 : index
    %50 = vector.load %arg5[%c0_21, %c112] : memref<4x512xf32, #tpu.memory_space<vmem>>, vector<4x256xf32>
    %51 = vector.extract_strided_slice %39 {offsets = [1, 0, 0], sizes = [1, 8, 4], strides = [1, 1, 1]} : vector<9x8x4xf32> to vector<1x8x4xf32>
    %52 = vector.shape_cast %51 : vector<1x8x4xf32> to vector<8x4xf32>
    %cst_22 = arith.constant dense<0.000000e+00> : vector<8x256xf32>
    %53 = tpu.matmul %52, %50, %cst_22 {dimension_numbers = #tpu.dot_dimension_numbers<[1], [0], [0], [1], [0, 0, 1, 1], [], []>} : vector<8x4xf32>, vector<4x256xf32>, vector<8x256xf32> -> vector<8x256xf32>
    %54 = arith.addf %49, %53 : vector<8x256xf32>
    %c0_23 = arith.constant 0 : index
    %c113 = arith.constant 113 : index
    %55 = vector.load %arg5[%c0_23, %c113] : memref<4x512xf32, #tpu.memory_space<vmem>>, vector<4x256xf32>
    %cst_24 = arith.constant 0.000000e+00 : f32
    %56 = vector.shape_cast %30 : vector<1x256xi1> to vector<1x256xi1>
    %57 = vector.broadcast %56 : vector<1x256xi1> to vector<4x256xi1>
    %58 = vector.broadcast %cst_24 : f32 to vector<4x256xf32>
    %59 = arith.select %57, %55, %58 : vector<4x256xi1>, vector<4x256xf32>
    %60 = vector.extract_strided_slice %39 {offsets = [2, 0, 0], sizes = [1, 8, 4], strides = [1, 1, 1]} : vector<9x8x4xf32> to vector<1x8x4xf32>
    %61 = vector.shape_cast %60 : vector<1x8x4xf32> to vector<8x4xf32>
    %cst_25 = arith.constant dense<0.000000e+00> : vector<8x256xf32>
    %62 = tpu.matmul %61, %59, %cst_25 {dimension_numbers = #tpu.dot_dimension_numbers<[1], [0], [0], [1], [0, 0, 1, 1], [], []>} : vector<8x4xf32>, vector<4x256xf32>, vector<8x256xf32> -> vector<8x256xf32>
    %63 = arith.addf %54, %62 : vector<8x256xf32>
    %c0_26 = arith.constant 0 : index
    %c127 = arith.constant 127 : index
    %64 = vector.load %arg5[%c0_26, %c127] : memref<4x512xf32, #tpu.memory_space<vmem>>, vector<4x256xf32>
    %cst_27 = arith.constant 0.000000e+00 : f32
    %65 = vector.shape_cast %25 : vector<1x256xi1> to vector<1x256xi1>
    %66 = vector.broadcast %65 : vector<1x256xi1> to vector<4x256xi1>
    %67 = vector.broadcast %cst_27 : f32 to vector<4x256xf32>
    %68 = arith.select %66, %64, %67 : vector<4x256xi1>, vector<4x256xf32>
    %69 = vector.extract_strided_slice %39 {offsets = [3, 0, 0], sizes = [1, 8, 4], strides = [1, 1, 1]} : vector<9x8x4xf32> to vector<1x8x4xf32>
    %70 = vector.shape_cast %69 : vector<1x8x4xf32> to vector<8x4xf32>
    %cst_28 = arith.constant dense<0.000000e+00> : vector<8x256xf32>
    %71 = tpu.matmul %70, %68, %cst_28 {dimension_numbers = #tpu.dot_dimension_numbers<[1], [0], [0], [1], [0, 0, 1, 1], [], []>} : vector<8x4xf32>, vector<4x256xf32>, vector<8x256xf32> -> vector<8x256xf32>
    %72 = arith.addf %63, %71 : vector<8x256xf32>
    %c0_29 = arith.constant 0 : index
    %c128_30 = arith.constant 128 : index
    %73 = vector.load %arg5[%c0_29, %c128_30] : memref<4x512xf32, #tpu.memory_space<vmem>>, vector<4x256xf32>
    %74 = vector.extract_strided_slice %39 {offsets = [4, 0, 0], sizes = [1, 8, 4], strides = [1, 1, 1]} : vector<9x8x4xf32> to vector<1x8x4xf32>
    %75 = vector.shape_cast %74 : vector<1x8x4xf32> to vector<8x4xf32>
    %cst_31 = arith.constant dense<0.000000e+00> : vector<8x256xf32>
    %76 = tpu.matmul %75, %73, %cst_31 {dimension_numbers = #tpu.dot_dimension_numbers<[1], [0], [0], [1], [0, 0, 1, 1], [], []>} : vector<8x4xf32>, vector<4x256xf32>, vector<8x256xf32> -> vector<8x256xf32>
    %77 = arith.addf %72, %76 : vector<8x256xf32>
    %c0_32 = arith.constant 0 : index
    %c129 = arith.constant 129 : index
    %78 = vector.load %arg5[%c0_32, %c129] : memref<4x512xf32, #tpu.memory_space<vmem>>, vector<4x256xf32>
    %cst_33 = arith.constant 0.000000e+00 : f32
    %79 = vector.shape_cast %30 : vector<1x256xi1> to vector<1x256xi1>
    %80 = vector.broadcast %79 : vector<1x256xi1> to vector<4x256xi1>
    %81 = vector.broadcast %cst_33 : f32 to vector<4x256xf32>
    %82 = arith.select %80, %78, %81 : vector<4x256xi1>, vector<4x256xf32>
    %83 = vector.extract_strided_slice %39 {offsets = [5, 0, 0], sizes = [1, 8, 4], strides = [1, 1, 1]} : vector<9x8x4xf32> to vector<1x8x4xf32>
    %84 = vector.shape_cast %83 : vector<1x8x4xf32> to vector<8x4xf32>
    %cst_34 = arith.constant dense<0.000000e+00> : vector<8x256xf32>
    %85 = tpu.matmul %84, %82, %cst_34 {dimension_numbers = #tpu.dot_dimension_numbers<[1], [0], [0], [1], [0, 0, 1, 1], [], []>} : vector<8x4xf32>, vector<4x256xf32>, vector<8x256xf32> -> vector<8x256xf32>
    %86 = arith.addf %77, %85 : vector<8x256xf32>
    %c0_35 = arith.constant 0 : index
    %c143 = arith.constant 143 : index
    %87 = vector.load %arg5[%c0_35, %c143] : memref<4x512xf32, #tpu.memory_space<vmem>>, vector<4x256xf32>
    %cst_36 = arith.constant 0.000000e+00 : f32
    %88 = vector.shape_cast %25 : vector<1x256xi1> to vector<1x256xi1>
    %89 = vector.broadcast %88 : vector<1x256xi1> to vector<4x256xi1>
    %90 = vector.broadcast %cst_36 : f32 to vector<4x256xf32>
    %91 = arith.select %89, %87, %90 : vector<4x256xi1>, vector<4x256xf32>
    %92 = vector.extract_strided_slice %39 {offsets = [6, 0, 0], sizes = [1, 8, 4], strides = [1, 1, 1]} : vector<9x8x4xf32> to vector<1x8x4xf32>
    %93 = vector.shape_cast %92 : vector<1x8x4xf32> to vector<8x4xf32>
    %cst_37 = arith.constant dense<0.000000e+00> : vector<8x256xf32>
    %94 = tpu.matmul %93, %91, %cst_37 {dimension_numbers = #tpu.dot_dimension_numbers<[1], [0], [0], [1], [0, 0, 1, 1], [], []>} : vector<8x4xf32>, vector<4x256xf32>, vector<8x256xf32> -> vector<8x256xf32>
    %95 = arith.addf %86, %94 : vector<8x256xf32>
    %c0_38 = arith.constant 0 : index
    %c144 = arith.constant 144 : index
    %96 = vector.load %arg5[%c0_38, %c144] : memref<4x512xf32, #tpu.memory_space<vmem>>, vector<4x256xf32>
    %97 = vector.extract_strided_slice %39 {offsets = [7, 0, 0], sizes = [1, 8, 4], strides = [1, 1, 1]} : vector<9x8x4xf32> to vector<1x8x4xf32>
    %98 = vector.shape_cast %97 : vector<1x8x4xf32> to vector<8x4xf32>
    %cst_39 = arith.constant dense<0.000000e+00> : vector<8x256xf32>
    %99 = tpu.matmul %98, %96, %cst_39 {dimension_numbers = #tpu.dot_dimension_numbers<[1], [0], [0], [1], [0, 0, 1, 1], [], []>} : vector<8x4xf32>, vector<4x256xf32>, vector<8x256xf32> -> vector<8x256xf32>
    %100 = arith.addf %95, %99 : vector<8x256xf32>
    %c0_40 = arith.constant 0 : index
    %c145 = arith.constant 145 : index
    %101 = vector.load %arg5[%c0_40, %c145] : memref<4x512xf32, #tpu.memory_space<vmem>>, vector<4x256xf32>
    %cst_41 = arith.constant 0.000000e+00 : f32
    %102 = vector.shape_cast %30 : vector<1x256xi1> to vector<1x256xi1>
    %103 = vector.broadcast %102 : vector<1x256xi1> to vector<4x256xi1>
    %104 = vector.broadcast %cst_41 : f32 to vector<4x256xf32>
    %105 = arith.select %103, %101, %104 : vector<4x256xi1>, vector<4x256xf32>
    %106 = vector.extract_strided_slice %39 {offsets = [8, 0, 0], sizes = [1, 8, 4], strides = [1, 1, 1]} : vector<9x8x4xf32> to vector<1x8x4xf32>
    %107 = vector.shape_cast %106 : vector<1x8x4xf32> to vector<8x4xf32>
    %cst_42 = arith.constant dense<0.000000e+00> : vector<8x256xf32>
    %108 = tpu.matmul %107, %105, %cst_42 {dimension_numbers = #tpu.dot_dimension_numbers<[1], [0], [0], [1], [0, 0, 1, 1], [], []>} : vector<8x4xf32>, vector<4x256xf32>, vector<8x256xf32> -> vector<8x256xf32>
    %109 = arith.addf %100, %108 : vector<8x256xf32>
    %c0_43 = arith.constant 0 : index
    %c0_44 = arith.constant 0 : index
    %c0_45 = arith.constant 0 : index
    %110 = vector.load %arg4[%c0_43, %c0_44, %c0_45] : memref<1x8x256xf32, #tpu.memory_space<vmem>>, vector<1x8x256xf32>
    %111 = vector.shape_cast %110 : vector<1x8x256xf32> to vector<8x256xf32>
    %112 = vector.shape_cast %109 : vector<8x256xf32> to vector<1x8x256xf32>
    tpu.vector_store %arg4[%c0_43, %c0_44, %c0_45], %112 {strides = array<i32>} : memref<1x8x256xf32, #tpu.memory_space<vmem>>, vector<1x8x256xf32>,
    return
  }
  func.func @transform_0(%arg0: i32) -> (i32, i32, i32) {
    %c0_i32 = arith.constant 0 : i32
    %c0_i32_0 = arith.constant 0 : i32
    %c0_i32_1 = arith.constant 0 : i32
    return %arg0, %c0_i32, %c0_i32_0 : i32, i32, i32
  }
  func.func @transform_1(%arg0: i32) -> (i32, i32, i32) {
    %c0_i32 = arith.constant 0 : i32
    %c0_i32_0 = arith.constant 0 : i32
    %c0_i32_1 = arith.constant 0 : i32
    return %arg0, %c0_i32, %c0_i32_0 : i32, i32, i32
  }
  func.func @transform_2(%arg0: i32) -> (i32, i32, i32) {
    %c0_i32 = arith.constant 0 : i32
    %c0_i32_0 = arith.constant 0 : i32
    %c0_i32_1 = arith.constant 0 : i32
    %c0_i32_2 = arith.constant 0 : i32
    return %c0_i32, %c0_i32_0, %c0_i32_1 : i32, i32, i32
  }
  func.func @transform_3(%arg0: i32) -> (i32, i32, i32) {
    %c0_i32 = arith.constant 0 : i32
    %c0_i32_0 = arith.constant 0 : i32
    %c0_i32_1 = arith.constant 0 : i32
    return %arg0, %c0_i32, %c0_i32_0 : i32, i32, i32
  }
}

</mosaic_0001>

<llo_original>
// kernel: tpu_custom_call.1
$region0: #{tpu_custom_call.1}
  #allocation0 [shape = 'u32[]', space=smem, size = 0x4, offset = 0x4, fixed_abs, tag = 'smem constant byte address 0x4 - core index']
  #allocation1 [shape = 'u32[144,128]{1,0:T(1,128)}', space=vmem, size = 0x12000, scoped, tag = 'internal scratch']
  #allocation2 [shape = 'f32[4,512]{1,0:T(4,128)}', space=vmem, size = 0x2000, scoped, tag = 'scratch operand']
  %s0 = inlined_call_operand.vmem [shape: f32[2,4,256], index: 0, kind: input, shape index: {}]
  %s1 = inlined_call_operand.vmem [shape: f32[2,1,4], index: 1, kind: input, shape index: {}]
  %s2 = inlined_call_operand.vmem [shape: f32[9,8,4], index: 2, kind: input, shape index: {}]
  %s3 = inlined_call_operand.hbm [shape: f32[2,8,256], index: 3, kind: output, shape index: {}]
  %s4 = sld [smem:[#allocation0]]
  $region45: #{tpu_custom_call.1} parent=0
    _
  %s6 = ssub.s32 1, %s4
  %s7 = scalar_select 0, %s6, %s4
  $region1: #{tpu_custom_call.1} parent=0
    #allocation3 [shape = 'u8[16384]{0}', space=vmem, size = 0x4000, scoped, tag = 'output window, operand 0']
    #allocation4 [shape = 's32[2]{0}', space=sflag, size = 0x8, scoped, tag = 'scoped memory for tpu_custom_call.1']
    %8 = vsyncpa [#allocation4], 0
    %s9 = scalar_lea.sflag [#allocation4], 1
    %10 = vsyncpa %s9, 0
    loop: start=0, step=1, limit=4
    $region2: #{tpu_custom_call.1} parent=1 // loop_pre_header
      _
    $region3: #{tpu_custom_call.1} parent=1 // loop_header
      %s12 = sphi 0, %s16
      %p13 = scmp.ge.s32.totalorder %s12, 4
      %s22 = sphi 0, %s24
      %s25 = sphi 0, %s22
      %s26 = sphi 0, %s25
      %s42 = sphi 0, %s26
      %s48 = sphi 0, %s50
      %s51 = sphi 0, %s48
      %s52 = sphi 0, %s51
      %s68 = sphi 0, %s52
      %s72 = sphi 0, %s72
      %s74 = sphi 0, %s72
      %s75 = sphi 0, %s74
      %s89 = sphi 0, %s75
      %s95 = sphi 0, %s97
      %s98 = sphi 0, %s95
      %s99 = sphi 0, %s98
      %s115 = sphi 0, %s99
    $region4: #{tpu_custom_call.1} parent=1 // loop_header_branch
      %15 = sbr.rel (%p13) target = $region8
    $region5: #{tpu_custom_call.1} parent=1 // loop_body
      %s17 = ssub.s32 %s12, 1
      %s18 = ssub.s32 %s12, 2
      %s19 = sadd.s32 %s12, 1
      %s20 = ssub.s32 %s12, %s19
      %p21 = scmp.eq.s32.totalorder %s20, 0
      %s23 = sadd.s32 %s22, 1
      %s24 = scalar_select %p21, %s22, %s23
      %p27 = pneg %p21
      %p28 = scmp.eq.s32.totalorder %s12, 1
      %p29 = por %p27, %p28
      %p30 = scmp.ne.s32.totalorder %s22, %s25
      %p31 = scmp.eq.s32.totalorder %s12, 0
      %p32 = por %p30, %p31
      %p33 = scmp.ne.s32.totalorder %s22, %s25
      %p34 = scmp.eq.s32.totalorder %s17, 1
      %p35 = por %p33, %p34
      %p36 = scmp.ne.s32.totalorder %s25, %s26
      %p37 = scmp.eq.s32.totalorder %s17, 0
      %p38 = por %p36, %p37
      %p39 = scmp.ne.s32.totalorder %s25, %s26
      %p40 = scmp.eq.s32.totalorder %s18, 1
      %p41 = por %p39, %p40
      %p43 = scmp.ne.s32.totalorder %s26, %s42
      %p44 = scmp.eq.s32.totalorder %s18, 0
      %p45 = por %p43, %p44
      %s46 = ssub.s32 %s12, %s19
      %p47 = scmp.eq.s32.totalorder %s46, 0
      %s49 = sadd.s32 %s48, 1
      %s50 = scalar_select %p47, %s48, %s49
      %p53 = pneg %p47
      %p54 = scmp.eq.s32.totalorder %s12, 1
      %p55 = por %p53, %p54
      %p56 = scmp.ne.s32.totalorder %s48, %s51
      %p57 = scmp.eq.s32.totalorder %s12, 0
      %p58 = por %p56, %p57
      %p59 = scmp.ne.s32.totalorder %s48, %s51
      %p60 = scmp.eq.s32.totalorder %s17, 1
      %p61 = por %p59, %p60
      %p62 = scmp.ne.s32.totalorder %s51, %s52
      %p63 = scmp.eq.s32.totalorder %s17, 0
      %p64 = por %p62, %p63
      %p65 = scmp.ne.s32.totalorder %s51, %s52
      %p66 = scmp.eq.s32.totalorder %s18, 1
      %p67 = por %p65, %p66
      %p69 = scmp.ne.s32.totalorder %s52, %s68
      %p70 = scmp.eq.s32.totalorder %s18, 0
      %p71 = por %p69, %p70
      %s73 = sadd.s32 %s72, 1
      %p76 = scmp.eq.s32.totalorder %s12, 1
      %p77 = scmp.ne.s32.totalorder %s72, %s74
      %p78 = scmp.eq.s32.totalorder %s12, 0
      %p79 = por %p77, %p78
      %p80 = scmp.ne.s32.totalorder %s72, %s74
      %p81 = scmp.eq.s32.totalorder %s17, 1
      %p82 = por %p80, %p81
      %p83 = scmp.ne.s32.totalorder %s74, %s75
      %p84 = scmp.eq.s32.totalorder %s17, 0
      %p85 = por %p83, %p84
      %p86 = scmp.ne.s32.totalorder %s74, %s75
      %p87 = scmp.eq.s32.totalorder %s18, 1
      %p88 = por %p86, %p87
      %p90 = scmp.ne.s32.totalorder %s75, %s89
      %p91 = scmp.eq.s32.totalorder %s18, 0
      %p92 = por %p90, %p91
      %s93 = ssub.s32 %s12, %s19
      %p94 = scmp.eq.s32.totalorder %s93, 0
      %s96 = sadd.s32 %s95, 1
      %s97 = scalar_select %p94, %s95, %s96
      %p100 = pneg %p94
      %p101 = scmp.eq.s32.totalorder %s12, 1
      %p102 = por %p100, %p101
      %p103 = scmp.ne.s32.totalorder %s95, %s98
      %p104 = scmp.eq.s32.totalorder %s12, 0
      %p105 = por %p103, %p104
      %p106 = scmp.ne.s32.totalorder %s95, %s98
      %p107 = scmp.eq.s32.totalorder %s17, 1
      %p108 = por %p106, %p107
      %p109 = scmp.ne.s32.totalorder %s98, %s99
      %p110 = scmp.eq.s32.totalorder %s17, 0
      %p111 = por %p109, %p110
      %p112 = scmp.ne.s32.totalorder %s98, %s99
      %p113 = scmp.eq.s32.totalorder %s18, 1
      %p114 = por %p112, %p113
      %p116 = scmp.ne.s32.totalorder %s99, %s115
      %p117 = scmp.eq.s32.totalorder %s18, 0
      %p118 = por %p116, %p117
      %p119 = scmp.le.s32.totalorder 1, %s12
      %p120 = scmp.lt.s32.totalorder %s12, 3
      %p121 = pnand %p119, %p120
      %p122 = pneg %p121
      // Predicated region
      $region9: #{tpu_custom_call.1} parent=5 // pred_check
        _
      $region10: #{tpu_custom_call.1} parent=5 // pred_check_branch
        %124 = sbr.rel (%p121) target = $region12
      $region11: #{tpu_custom_call.1} parent=5 // pred_region
        %s125 = ssub.s32 %s12, 1
        // Predicated region
        $region13: #{tpu_custom_call.1} parent=11 // pred_check
          %p126 = pneg %p85
        $region14: #{tpu_custom_call.1} parent=11 // pred_check_branch
          %128 = sbr.rel (%p126) target = $region16
        $region15: #{tpu_custom_call.1} parent=11 // pred_region
          _
        $region16: #{tpu_custom_call.1} parent=11 // pred_fallthru
          _
      $region12: #{tpu_custom_call.1} parent=5 // pred_fallthru
        _
      %p129 = scmp.lt.s32.totalorder %s12, 2
      // Predicated region
      $region17: #{tpu_custom_call.1} parent=5 // pred_check
        %p130 = pneg %p129
      $region18: #{tpu_custom_call.1} parent=5 // pred_check_branch
        %132 = sbr.rel (%p130) target = $region20
      $region19: #{tpu_custom_call.1} parent=5 // pred_region
        // Predicated region
        $region21: #{tpu_custom_call.1} parent=19 // pred_check
          %p133 = pneg %p32
        $region22: #{tpu_custom_call.1} parent=19 // pred_check_branch
          %135 = sbr.rel (%p133) target = $region24
        $region23: #{tpu_custom_call.1} parent=19 // pred_region
          %p136 = scmp.lt.s32.totalorder %s12, 1
          %s137 = scalar_select %p136, %s12, 1
          %s138 = smul.addr %s137, 2
          %s139 = smul.addr %s138, 4
          %s140 = scalar_lea.vmem %s0, %s139
        $region24: #{tpu_custom_call.1} parent=19 // pred_fallthru
          _
        // Predicated region
        $region25: #{tpu_custom_call.1} parent=19 // pred_check
          %p141 = pneg %p58
        $region26: #{tpu_custom_call.1} parent=19 // pred_check_branch
          %143 = sbr.rel (%p141) target = $region28
        $region27: #{tpu_custom_call.1} parent=19 // pred_region
          %p144 = scmp.lt.s32.totalorder %s12, 1
          %s145 = scalar_select %p144, %s12, 1
          %s146 = scalar_lea.vmem %s1, %s145
        $region28: #{tpu_custom_call.1} parent=19 // pred_fallthru
          _
      $region20: #{tpu_custom_call.1} parent=5 // pred_fallthru
        _
      %p147 = scmp.le.s32.totalorder 1, %s12
      %p148 = scmp.lt.s32.totalorder %s12, 3
      %p149 = pnand %p147, %p148
      %p150 = pneg %p149
      // Predicated region
      $region29: #{tpu_custom_call.1} parent=5 // pred_check
        _
      $region30: #{tpu_custom_call.1} parent=5 // pred_check_branch
        %152 = sbr.rel (%p149) target = $region32
      $region31: #{tpu_custom_call.1} parent=5 // pred_region
        %s153 = ssub.s32 %s12, 1
        %p154 = scmp.lt.s32.totalorder %s17, 1
        %s155 = scalar_select %p154, %s17, 1
        %s156 = smul.addr %s155, 2
        %s157 = smul.addr %s156, 4
        %s158 = scalar_lea.vmem %s0, %s157
        %p159 = pneg %p38
        %p160 = pneg %p35
        %p161 = scmp.lt.s32.totalorder %s17, 1
        %s162 = scalar_select %p161, %s17, 1
        %s163 = scalar_lea.vmem %s1, %s162
        %p164 = pneg %p64
        %p165 = pneg %p61
        %p166 = pneg %p85
        %p167 = pneg %p82
        %p168 = pneg %p111
        %p169 = pneg %p108
        %s170 = sand.u32 %s98, 1
        %s171 = scalar_lea.sflag [#allocation4], %s170
        %s172 = sand.u32 %s98, 1
        %s173 = smul.addr %s172, 16
        %s174 = scalar_lea.vmem [#allocation3], %s173
        %p175 = scmp.lt.s32.totalorder %s17, 1
        %s176 = scalar_select %p175, %s17, 1
        %s177 = smul.addr %s176, 2
        %s178 = smul.addr %s177, 4
        %s179 = scalar_lea.vmem %s0, %s178
        %p180 = scmp.lt.s32.totalorder %s17, 1
        %s181 = scalar_select %p180, %s17, 1
        %s182 = scalar_lea.vmem %s1, %s181
        %183 = vst [vmem:[#allocation2] sm:$0xf] 0.0
        %184 = vst [vmem:[#allocation2 + $0xc] sm:$0xf] 0.0
        %v185 = vlaneseq
        %v186 = vand.u32 %v185, 127
        %v187 = vadd.s32 %v186, 128
        %vm188 = vcmp.lt.s32.totalorder %v186, 0
        %v189 = vsub.s32 0, %v186
        %v190 = vsel %vm188, %v189, %v186
        %v191 = vshrl.u32 %v190, 4
        %v192 = vand.u32 %v190, 15
        %v193 = vsub.s32 0, %v192
        %v194 = vsel %vm188, %v193, %v192
        %vm195 = vcmp.lt.s32.totalorder %v187, 0
        %v196 = vsub.s32 0, %v187
        %v197 = vsel %vm195, %v196, %v187
        %v198 = vshrl.u32 %v197, 4
        %v199 = vand.u32 %v197, 15
        %v200 = vsub.s32 0, %v199
        %v201 = vsel %vm195, %v200, %v199
        %vm202 = vcmp.ne.s32.totalorder %v194, 0
        %vm203 = vcmp.ne.s32.totalorder %v201, 0
        %vm204 = vcmp.lt.s32.totalorder %v194, 0
        %vm205 = vcmp.lt.s32.totalorder %v201, 0
        %vm206 = vmand %vm204, %vm202
        %vm207 = vmand %vm205, %vm203
        %v208 = vadd.s32 %v194, 16
        %v209 = vadd.s32 %v201, 16
        %v210 = vsel %vm206, %v208, %v194
        %v211 = vsel %vm207, %v209, %v201
        %vm212 = vcmp.ge.s32.totalorder %v210, 1
        %vm213 = vcmp.ge.s32.totalorder %v211, 1
        %vm214 = vcmp.lt.s32.totalorder %v210, 17
        %vm215 = vcmp.lt.s32.totalorder %v211, 17
        %vm216 = vmand %vm212, %vm214
        %vm217 = vmand %vm213, %vm215
        %vm218 = vcmp.ge.s32.totalorder %v210, 4294967295
        %vm219 = vcmp.ge.s32.totalorder %v211, 4294967295
        %vm220 = vcmp.lt.s32.totalorder %v210, 15
        %vm221 = vcmp.lt.s32.totalorder %v211, 15
        %vm222 = vmand %vm218, %vm220
        %vm223 = vmand %vm219, %vm221
        %v224 = vld [vmem:[%s179] sm:$0xff]
        %225 = vst [vmem:[#allocation2 + $0x4] sm:$0xff] %v224
        %v226 = vld [vmem:[%s2] sm:$0xff]
        %v227 = vld [vmem:[%s2 + $0x8] sm:$0xff]
        %v228 = vld [vmem:[%s2 + $0x10] sm:$0xff]
        %v229 = vld [vmem:[%s2 + $0x18] sm:$0xff]
        %v230 = vld [vmem:[%s2 + $0x20] sm:$0xff]
        %v231 = vld [vmem:[%s2 + $0x28] sm:$0xff]
        %v232 = vld [vmem:[%s2 + $0x30] sm:$0xff]
        %v233 = vld [vmem:[%s2 + $0x38] sm:$0xff]
        %v234 = vld [vmem:[%s2 + $0x40] sm:$0xff]
        %v235 = vld [vmem:[%s182] sm:$0x1]
        %v237 = vlaneseq
        %v238 = vshrl.u32 %v237, 7
        %v239 = vsub.s32 0, %v238
        %v240 = vrot.slane %v235, %v239
        %v242 = vmul.f32 %v226, %v240
        %v243 = vmul.f32 %v227, %v240
        %v244 = vmul.f32 %v228, %v240
        %v245 = vmul.f32 %v229, %v240
        %v246 = vmul.f32 %v230, %v240
        %v247 = vmul.f32 %v231, %v240
        %v248 = vmul.f32 %v232, %v240
        %v249 = vmul.f32 %v233, %v240
        %v250 = vmul.f32 %v234, %v240
        %v251 = vld [vmem:[#allocation2] sm:$0xff]
        %v252 = vld [vmem:[#allocation2 + $0x8] sm:$0xf]
        %v253 = vsel %vm216, 1, 0
        %v254 = vsel %vm217, 1, 0
        %vm255 = vcmp.eq.s32.totalorder %v253, 1
        %vm256 = vcmp.eq.s32.totalorder %v254, 1
        %v259 = vcombine.high %v251, %v251
        %260 = vrot.lane.b32.xlu0 %v251, 17
        %v261 = vpop.permute.xlu0 %260
        %262 = vrot.lane.b32.xlu0 %v259, 17
        %v263 = vpop.permute.xlu0 %262
        %264 = vrot.lane.b32.xlu0 %v252, 17
        %v265 = vpop.permute.xlu0 %264
        %vm266 = vcmask 138240
        %v267 = vsel %vm266, %v261, %v263
        %v268 = vsel %vm266, %v263, %v265
        %v271 = vsel %vm255, %v267, 0.0
        %v272 = vsel %vm256, %v268, 0.0
        %273 = vrot.lane.b32.xlu0 %v251, 16
        %v274 = vpop.permute.xlu0 %273
        %275 = vrot.lane.b32.xlu0 %v259, 16
        %v276 = vpop.permute.xlu0 %275
        %277 = vrot.lane.b32.xlu0 %v252, 16
        %v278 = vpop.permute.xlu0 %277
        %vm279 = vcmask 130048
        %v280 = vsel %vm279, %v274, %v276
        %v281 = vsel %vm279, %v276, %v278
        %vm282 = vcmask 31744
        %v284 = vsel %vm282, %v243, 0
        %vm286 = vcmask 1043456
        %v287 = vsel %vm286, %v280, 0
        %v289 = vsel %vm286, %v281, 0
        %291 = vmatprep.subr.mxu0 0.0
        %292 = vmatpush1.msra.mxu0 0.0
        %293 = vmatprep.subr.mxu0 0.0
        %294 = vmatpush1.msra.mxu0 0.0
        %295 = vmatprep.subr.mxu0 0.0
        %296 = vmatpush1.msra.mxu0 0.0
        %297 = vmatprep.subr.mxu0 0.0
        %298 = vmatpush1.msra.mxu0 0.0
        %299 = vmatprep.subr.mxu0 0.0
        %300 = vmatpush1.msra.mxu0 0.0
        %301 = vmatprep.subr.mxu0 0.0
        %302 = vmatpush1.msra.mxu0 0.0
        %303 = vmatprep.subr.mxu0 0.0
        %304 = vmatpush1.msra.mxu0 0.0
        %305 = vmatprep.subr.mxu0 0.0
        %306 = vmatpush1.msra.mxu0 0.0
        %307 = vmatprep.subr.mxu0 0.0
        %308 = vmatpush1.msra.mxu0 0.0
        %309 = vmatprep.subr.mxu0 0.0
        %310 = vmatpush1.msra.mxu0 0.0
        %311 = vmatprep.subr.mxu0 0.0
        %312 = vmatpush1.msra.mxu0 0.0
        %313 = vmatprep.subr.mxu0 0.0
        %314 = vmatpush1.msra.mxu0 0.0
        %315 = vmatprep.subr.mxu0 0.0
        %316 = vmatpush1.msra.mxu0 0.0
        %317 = vmatprep.subr.mxu0 0.0
        %318 = vmatpush1.msra.mxu0 0.0
        %319 = vmatprep.subr.mxu0 0.0
        %320 = vmatpush1.msra.mxu0 0.0
        %321 = vmatprep.subr.mxu0 %v289
        %322 = vmatpush1.msra.mxu0 %v287
        %323 = vmatprep.subr.mxu0 0.0
        %324 = vmatpush2.msra.mxu0 0.0
        %325 = vmatprep.subr.mxu0 0.0
        %326 = vmatpush2.msra.mxu0 0.0
        %327 = vmatprep.subr.mxu0 0.0
        %328 = vmatpush2.msra.mxu0 0.0
        %329 = vmatprep.subr.mxu0 0.0
        %330 = vmatpush2.msra.mxu0 0.0
        %331 = vmatprep.subr.mxu0 0.0
        %332 = vmatpush2.msra.mxu0 0.0
        %333 = vmatprep.subr.mxu0 0.0
        %334 = vmatpush2.msra.mxu0 0.0
        %335 = vmatprep.subr.mxu0 0.0
        %336 = vmatpush2.msra.mxu0 0.0
        %337 = vmatprep.subr.mxu0 0.0
        %338 = vmatpush2.msra.mxu0 0.0
        %339 = vmatprep.subr.mxu0 0.0
        %340 = vmatpush2.msra.mxu0 0.0
        %341 = vmatprep.subr.mxu0 0.0
        %342 = vmatpush2.msra.mxu0 0.0
        %343 = vmatprep.subr.mxu0 0.0
        %344 = vmatpush2.msra.mxu0 0.0
        %345 = vmatprep.subr.mxu0 0.0
        %346 = vmatpush2.msra.mxu0 0.0
        %347 = vmatprep.subr.mxu0 0.0
        %348 = vmatpush2.msra.mxu0 0.0
        %349 = vmatprep.subr.mxu0 0.0
        %350 = vmatpush2.msra.mxu0 0.0
        %351 = vmatprep.subr.mxu0 0.0
        %352 = vmatpush2.msra.mxu0 0.0
        %353 = vmatprep.subr.mxu0 0.0
        %354 = vmatpush2.msra.mxu0 0.0
        %355 = vmatprep.mubr.f32.mxu0 0.0
        %356 = vmatmul.mubr.f32.gmra.mxu0 %v284
        %v357 = vpop.f32.mrf.mxu0
        %v358 = vadd.f32 0.0, %v357
        %v359 = vpop.f32.mrf.mxu0
        %v360 = vadd.f32 0.0, %v359
        %361 = vdwg.mxu0
        %v363 = vsel %vm282, %v242, 0
        %v366 = vsel %vm286, %v271, 0
        %v369 = vsel %vm286, %v272, 0
        %371 = vmatprep.subr.mxu0 0.0
        %372 = vmatpush1.msra.mxu0 0.0
        %373 = vmatprep.subr.mxu0 0.0
        %374 = vmatpush1.msra.mxu0 0.0
        %375 = vmatprep.subr.mxu0 0.0
        %376 = vmatpush1.msra.mxu0 0.0
        %377 = vmatprep.subr.mxu0 0.0
        %378 = vmatpush1.msra.mxu0 0.0
        %379 = vmatprep.subr.mxu0 0.0
        %380 = vmatpush1.msra.mxu0 0.0
        %381 = vmatprep.subr.mxu0 0.0
        %382 = vmatpush1.msra.mxu0 0.0
        %383 = vmatprep.subr.mxu0 0.0
        %384 = vmatpush1.msra.mxu0 0.0
        %385 = vmatprep.subr.mxu0 0.0
        %386 = vmatpush1.msra.mxu0 0.0
        %387 = vmatprep.subr.mxu0 0.0
        %388 = vmatpush1.msra.mxu0 0.0
        %389 = vmatprep.subr.mxu0 0.0
        %390 = vmatpush1.msra.mxu0 0.0
        %391 = vmatprep.subr.mxu0 0.0
        %392 = vmatpush1.msra.mxu0 0.0
        %393 = vmatprep.subr.mxu0 0.0
        %394 = vmatpush1.msra.mxu0 0.0
        %395 = vmatprep.subr.mxu0 0.0
        %396 = vmatpush1.msra.mxu0 0.0
        %397 = vmatprep.subr.mxu0 0.0
        %398 = vmatpush1.msra.mxu0 0.0
        %399 = vmatprep.subr.mxu0 0.0
        %400 = vmatpush1.msra.mxu0 0.0
        %401 = vmatprep.subr.mxu0 %v369
        %402 = vmatpush1.msra.mxu0 %v366
        %403 = vmatprep.subr.mxu0 0.0
        %404 = vmatpush2.msra.mxu0 0.0
        %405 = vmatprep.subr.mxu0 0.0
        %406 = vmatpush2.msra.mxu0 0.0
        %407 = vmatprep.subr.mxu0 0.0
        %408 = vmatpush2.msra.mxu0 0.0
        %409 = vmatprep.subr.mxu0 0.0
        %410 = vmatpush2.msra.mxu0 0.0
        %411 = vmatprep.subr.mxu0 0.0
        %412 = vmatpush2.msra.mxu0 0.0
        %413 = vmatprep.subr.mxu0 0.0
        %414 = vmatpush2.msra.mxu0 0.0
        %415 = vmatprep.subr.mxu0 0.0
        %416 = vmatpush2.msra.mxu0 0.0
        %417 = vmatprep.subr.mxu0 0.0
        %418 = vmatpush2.msra.mxu0 0.0
        %419 = vmatprep.subr.mxu0 0.0
        %420 = vmatpush2.msra.mxu0 0.0
        %421 = vmatprep.subr.mxu0 0.0
        %422 = vmatpush2.msra.mxu0 0.0
        %423 = vmatprep.subr.mxu0 0.0
        %424 = vmatpush2.msra.mxu0 0.0
        %425 = vmatprep.subr.mxu0 0.0
        %426 = vmatpush2.msra.mxu0 0.0
        %427 = vmatprep.subr.mxu0 0.0
        %428 = vmatpush2.msra.mxu0 0.0
        %429 = vmatprep.subr.mxu0 0.0
        %430 = vmatpush2.msra.mxu0 0.0
        %431 = vmatprep.subr.mxu0 0.0
        %432 = vmatpush2.msra.mxu0 0.0
        %433 = vmatprep.subr.mxu0 0.0
        %434 = vmatpush2.msra.mxu0 0.0
        %435 = vmatprep.mubr.f32.mxu0 0.0
        %436 = vmatmul.mubr.f32.gmra.mxu0 %v363
        %v437 = vpop.f32.mrf.mxu0
        %v438 = vadd.f32 %v358, %v437
        %v439 = vpop.f32.mrf.mxu0
        %v440 = vadd.f32 %v360, %v439
        %441 = vdwg.mxu0
        %v442 = vld [vmem:[#allocation2] sm:$0xff]
        %v443 = vld [vmem:[#allocation2 + $0x8] sm:$0xf]
        %v444 = vsel %vm222, 1, 0
        %v445 = vsel %vm223, 1, 0
        %vm446 = vcmp.eq.s32.totalorder %v444, 1
        %vm447 = vcmp.eq.s32.totalorder %v445, 1
        %v450 = vcombine.high %v442, %v442
        %451 = vrot.lane.b32.xlu0 %v442, 15
        %v452 = vpop.permute.xlu0 %451
        %453 = vrot.lane.b32.xlu0 %v450, 15
        %v454 = vpop.permute.xlu0 %453
        %455 = vrot.lane.b32.xlu0 %v443, 15
        %v456 = vpop.permute.xlu0 %455
        %vm457 = vcmask 121856
        %v458 = vsel %vm457, %v452, %v454
        %v459 = vsel %vm457, %v454, %v456
        %v462 = vsel %vm446, %v458, 0.0
        %v463 = vsel %vm447, %v459, 0.0
        %v465 = vsel %vm282, %v244, 0
        %v468 = vsel %vm286, %v462, 0
        %v471 = vsel %vm286, %v463, 0
        %473 = vmatprep.subr.mxu0 0.0
        %474 = vmatpush1.msra.mxu0 0.0
        %475 = vmatprep.subr.mxu0 0.0
        %476 = vmatpush1.msra.mxu0 0.0
        %477 = vmatprep.subr.mxu0 0.0
        %478 = vmatpush1.msra.mxu0 0.0
        %479 = vmatprep.subr.mxu0 0.0
        %480 = vmatpush1.msra.mxu0 0.0
        %481 = vmatprep.subr.mxu0 0.0
        %482 = vmatpush1.msra.mxu0 0.0
        %483 = vmatprep.subr.mxu0 0.0
        %484 = vmatpush1.msra.mxu0 0.0
        %485 = vmatprep.subr.mxu0 0.0
        %486 = vmatpush1.msra.mxu0 0.0
        %487 = vmatprep.subr.mxu0 0.0
        %488 = vmatpush1.msra.mxu0 0.0
        %489 = vmatprep.subr.mxu0 0.0
        %490 = vmatpush1.msra.mxu0 0.0
        %491 = vmatprep.subr.mxu0 0.0
        %492 = vmatpush1.msra.mxu0 0.0
        %493 = vmatprep.subr.mxu0 0.0
        %494 = vmatpush1.msra.mxu0 0.0
        %495 = vmatprep.subr.mxu0 0.0
        %496 = vmatpush1.msra.mxu0 0.0
        %497 = vmatprep.subr.mxu0 0.0
        %498 = vmatpush1.msra.mxu0 0.0
        %499 = vmatprep.subr.mxu0 0.0
        %500 = vmatpush1.msra.mxu0 0.0
        %501 = vmatprep.subr.mxu0 0.0
        %502 = vmatpush1.msra.mxu0 0.0
        %503 = vmatprep.subr.mxu0 %v471
        %504 = vmatpush1.msra.mxu0 %v468
        %505 = vmatprep.subr.mxu0 0.0
        %506 = vmatpush2.msra.mxu0 0.0
        %507 = vmatprep.subr.mxu0 0.0
        %508 = vmatpush2.msra.mxu0 0.0
        %509 = vmatprep.subr.mxu0 0.0
        %510 = vmatpush2.msra.mxu0 0.0
        %511 = vmatprep.subr.mxu0 0.0
        %512 = vmatpush2.msra.mxu0 0.0
        %513 = vmatprep.subr.mxu0 0.0
        %514 = vmatpush2.msra.mxu0 0.0
        %515 = vmatprep.subr.mxu0 0.0
        %516 = vmatpush2.msra.mxu0 0.0
        %517 = vmatprep.subr.mxu0 0.0
        %518 = vmatpush2.msra.mxu0 0.0
        %519 = vmatprep.subr.mxu0 0.0
        %520 = vmatpush2.msra.mxu0 0.0
        %521 = vmatprep.subr.mxu0 0.0
        %522 = vmatpush2.msra.mxu0 0.0
        %523 = vmatprep.subr.mxu0 0.0
        %524 = vmatpush2.msra.mxu0 0.0
        %525 = vmatprep.subr.mxu0 0.0
        %526 = vmatpush2.msra.mxu0 0.0
        %527 = vmatprep.subr.mxu0 0.0
        %528 = vmatpush2.msra.mxu0 0.0
        %529 = vmatprep.subr.mxu0 0.0
        %530 = vmatpush2.msra.mxu0 0.0
        %531 = vmatprep.subr.mxu0 0.0
        %532 = vmatpush2.msra.mxu0 0.0
        %533 = vmatprep.subr.mxu0 0.0
        %534 = vmatpush2.msra.mxu0 0.0
        %535 = vmatprep.subr.mxu0 0.0
        %536 = vmatpush2.msra.mxu0 0.0
        %537 = vmatprep.mubr.f32.mxu0 0.0
        %538 = vmatmul.mubr.f32.gmra.mxu0 %v465
        %v539 = vpop.f32.mrf.mxu0
        %v540 = vadd.f32 0.0, %v539
        %v541 = vpop.f32.mrf.mxu0
        %v542 = vadd.f32 0.0, %v541
        %543 = vdwg.mxu0
        %v544 = vadd.f32 %v438, %v540
        %v545 = vadd.f32 %v440, %v542
        %v546 = vld [vmem:[#allocation2] sm:$0xff]
        %v547 = vld [vmem:[#allocation2 + $0x8] sm:$0xf]
        %v550 = vcombine.high %v546, %v546
        %551 = vrot.lane.b32.xlu0 %v546, 1
        %v552 = vpop.permute.xlu0 %551
        %553 = vrot.lane.b32.xlu0 %v550, 1
        %v554 = vpop.permute.xlu0 %553
        %555 = vrot.lane.b32.xlu0 %v547, 1
        %v556 = vpop.permute.xlu0 %555
        %vm557 = vcmask 7168
        %v558 = vsel %vm557, %v552, %v554
        %v559 = vsel %vm557, %v554, %v556
        %v562 = vsel %vm255, %v558, 0.0
        %v563 = vsel %vm256, %v559, 0.0
        %v565 = vsel %vm282, %v245, 0
        %v568 = vsel %vm286, %v562, 0
        %v571 = vsel %vm286, %v563, 0
        %573 = vmatprep.subr.mxu0 0.0
        %574 = vmatpush1.msra.mxu0 0.0
        %575 = vmatprep.subr.mxu0 0.0
        %576 = vmatpush1.msra.mxu0 0.0
        %577 = vmatprep.subr.mxu0 0.0
        %578 = vmatpush1.msra.mxu0 0.0
        %579 = vmatprep.subr.mxu0 0.0
        %580 = vmatpush1.msra.mxu0 0.0
        %581 = vmatprep.subr.mxu0 0.0
        %582 = vmatpush1.msra.mxu0 0.0
        %583 = vmatprep.subr.mxu0 0.0
        %584 = vmatpush1.msra.mxu0 0.0
        %585 = vmatprep.subr.mxu0 0.0
        %586 = vmatpush1.msra.mxu0 0.0
        %587 = vmatprep.subr.mxu0 0.0
        %588 = vmatpush1.msra.mxu0 0.0
        %589 = vmatprep.subr.mxu0 0.0
        %590 = vmatpush1.msra.mxu0 0.0
        %591 = vmatprep.subr.mxu0 0.0
        %592 = vmatpush1.msra.mxu0 0.0
        %593 = vmatprep.subr.mxu0 0.0
        %594 = vmatpush1.msra.mxu0 0.0
        %595 = vmatprep.subr.mxu0 0.0
        %596 = vmatpush1.msra.mxu0 0.0
        %597 = vmatprep.subr.mxu0 0.0
        %598 = vmatpush1.msra.mxu0 0.0
        %599 = vmatprep.subr.mxu0 0.0
        %600 = vmatpush1.msra.mxu0 0.0
        %601 = vmatprep.subr.mxu0 0.0
        %602 = vmatpush1.msra.mxu0 0.0
        %603 = vmatprep.subr.mxu0 %v571
        %604 = vmatpush1.msra.mxu0 %v568
        %605 = vmatprep.subr.mxu0 0.0
        %606 = vmatpush2.msra.mxu0 0.0
        %607 = vmatprep.subr.mxu0 0.0
        %608 = vmatpush2.msra.mxu0 0.0
        %609 = vmatprep.subr.mxu0 0.0
        %610 = vmatpush2.msra.mxu0 0.0
        %611 = vmatprep.subr.mxu0 0.0
        %612 = vmatpush2.msra.mxu0 0.0
        %613 = vmatprep.subr.mxu0 0.0
        %614 = vmatpush2.msra.mxu0 0.0
        %615 = vmatprep.subr.mxu0 0.0
        %616 = vmatpush2.msra.mxu0 0.0
        %617 = vmatprep.subr.mxu0 0.0
        %618 = vmatpush2.msra.mxu0 0.0
        %619 = vmatprep.subr.mxu0 0.0
        %620 = vmatpush2.msra.mxu0 0.0
        %621 = vmatprep.subr.mxu0 0.0
        %622 = vmatpush2.msra.mxu0 0.0
        %623 = vmatprep.subr.mxu0 0.0
        %624 = vmatpush2.msra.mxu0 0.0
        %625 = vmatprep.subr.mxu0 0.0
        %626 = vmatpush2.msra.mxu0 0.0
        %627 = vmatprep.subr.mxu0 0.0
        %628 = vmatpush2.msra.mxu0 0.0
        %629 = vmatprep.subr.mxu0 0.0
        %630 = vmatpush2.msra.mxu0 0.0
        %631 = vmatprep.subr.mxu0 0.0
        %632 = vmatpush2.msra.mxu0 0.0
        %633 = vmatprep.subr.mxu0 0.0
        %634 = vmatpush2.msra.mxu0 0.0
        %635 = vmatprep.subr.mxu0 0.0
        %636 = vmatpush2.msra.mxu0 0.0
        %637 = vmatprep.mubr.f32.mxu0 0.0
        %638 = vmatmul.mubr.f32.gmra.mxu0 %v565
        %v639 = vpop.f32.mrf.mxu0
        %v640 = vadd.f32 0.0, %v639
        %v641 = vpop.f32.mrf.mxu0
        %v642 = vadd.f32 0.0, %v641
        %643 = vdwg.mxu0
        %v644 = vadd.f32 %v544, %v640
        %v645 = vadd.f32 %v545, %v642
        %v646 = vld [vmem:[#allocation2 + $0x4] sm:$0xff]
        %v648 = vcombine.high %v646, %v646
        %v650 = vsel %vm282, %v246, 0
        %v652 = vsel %vm286, %v646, 0
        %v654 = vsel %vm286, %v648, 0
        %656 = vmatprep.subr.mxu0 0.0
        %657 = vmatpush1.msra.mxu0 0.0
        %658 = vmatprep.subr.mxu0 0.0
        %659 = vmatpush1.msra.mxu0 0.0
        %660 = vmatprep.subr.mxu0 0.0
        %661 = vmatpush1.msra.mxu0 0.0
        %662 = vmatprep.subr.mxu0 0.0
        %663 = vmatpush1.msra.mxu0 0.0
        %664 = vmatprep.subr.mxu0 0.0
        %665 = vmatpush1.msra.mxu0 0.0
        %666 = vmatprep.subr.mxu0 0.0
        %667 = vmatpush1.msra.mxu0 0.0
        %668 = vmatprep.subr.mxu0 0.0
        %669 = vmatpush1.msra.mxu0 0.0
        %670 = vmatprep.subr.mxu0 0.0
        %671 = vmatpush1.msra.mxu0 0.0
        %672 = vmatprep.subr.mxu0 0.0
        %673 = vmatpush1.msra.mxu0 0.0
        %674 = vmatprep.subr.mxu0 0.0
        %675 = vmatpush1.msra.mxu0 0.0
        %676 = vmatprep.subr.mxu0 0.0
        %677 = vmatpush1.msra.mxu0 0.0
        %678 = vmatprep.subr.mxu0 0.0
        %679 = vmatpush1.msra.mxu0 0.0
        %680 = vmatprep.subr.mxu0 0.0
        %681 = vmatpush1.msra.mxu0 0.0
        %682 = vmatprep.subr.mxu0 0.0
        %683 = vmatpush1.msra.mxu0 0.0
        %684 = vmatprep.subr.mxu0 0.0
        %685 = vmatpush1.msra.mxu0 0.0
        %686 = vmatprep.subr.mxu0 %v654
        %687 = vmatpush1.msra.mxu0 %v652
        %688 = vmatprep.subr.mxu0 0.0
        %689 = vmatpush2.msra.mxu0 0.0
        %690 = vmatprep.subr.mxu0 0.0
        %691 = vmatpush2.msra.mxu0 0.0
        %692 = vmatprep.subr.mxu0 0.0
        %693 = vmatpush2.msra.mxu0 0.0
        %694 = vmatprep.subr.mxu0 0.0
        %695 = vmatpush2.msra.mxu0 0.0
        %696 = vmatprep.subr.mxu0 0.0
        %697 = vmatpush2.msra.mxu0 0.0
        %698 = vmatprep.subr.mxu0 0.0
        %699 = vmatpush2.msra.mxu0 0.0
        %700 = vmatprep.subr.mxu0 0.0
        %701 = vmatpush2.msra.mxu0 0.0
        %702 = vmatprep.subr.mxu0 0.0
        %703 = vmatpush2.msra.mxu0 0.0
        %704 = vmatprep.subr.mxu0 0.0
        %705 = vmatpush2.msra.mxu0 0.0
        %706 = vmatprep.subr.mxu0 0.0
        %707 = vmatpush2.msra.mxu0 0.0
        %708 = vmatprep.subr.mxu0 0.0
        %709 = vmatpush2.msra.mxu0 0.0
        %710 = vmatprep.subr.mxu0 0.0
        %711 = vmatpush2.msra.mxu0 0.0
        %712 = vmatprep.subr.mxu0 0.0
        %713 = vmatpush2.msra.mxu0 0.0
        %714 = vmatprep.subr.mxu0 0.0
        %715 = vmatpush2.msra.mxu0 0.0
        %716 = vmatprep.subr.mxu0 0.0
        %717 = vmatpush2.msra.mxu0 0.0
        %718 = vmatprep.subr.mxu0 0.0
        %719 = vmatpush2.msra.mxu0 0.0
        %720 = vmatprep.mubr.f32.mxu0 0.0
        %721 = vmatmul.mubr.f32.gmra.mxu0 %v650
        %v722 = vpop.f32.mrf.mxu0
        %v723 = vadd.f32 0.0, %v722
        %v724 = vpop.f32.mrf.mxu0
        %v725 = vadd.f32 0.0, %v724
        %726 = vdwg.mxu0
        %v727 = vadd.f32 %v644, %v723
        %v728 = vadd.f32 %v645, %v725
        %v729 = vld [vmem:[#allocation2 + $0x4] sm:$0xff]
        %v730 = vld [vmem:[#allocation2 + $0xc] sm:$0xf]
        %v733 = vcombine.high %v729, %v729
        %734 = vrot.lane.b32.xlu0 %v729, 127
        %v735 = vpop.permute.xlu0 %734
        %736 = vrot.lane.b32.xlu0 %v733, 127
        %v737 = vpop.permute.xlu0 %736
        %738 = vrot.lane.b32.xlu0 %v730, 127
        %v739 = vpop.permute.xlu0 %738
        %vm740 = vcmask 1039360
        %v741 = vsel %vm740, %v735, %v737
        %v742 = vsel %vm740, %v737, %v739
        %v745 = vsel %vm446, %v741, 0.0
        %v746 = vsel %vm447, %v742, 0.0
        %v748 = vsel %vm282, %v247, 0
        %v751 = vsel %vm286, %v745, 0
        %v754 = vsel %vm286, %v746, 0
        %756 = vmatprep.subr.mxu0 0.0
        %757 = vmatpush1.msra.mxu0 0.0
        %758 = vmatprep.subr.mxu0 0.0
        %759 = vmatpush1.msra.mxu0 0.0
        %760 = vmatprep.subr.mxu0 0.0
        %761 = vmatpush1.msra.mxu0 0.0
        %762 = vmatprep.subr.mxu0 0.0
        %763 = vmatpush1.msra.mxu0 0.0
        %764 = vmatprep.subr.mxu0 0.0
        %765 = vmatpush1.msra.mxu0 0.0
        %766 = vmatprep.subr.mxu0 0.0
        %767 = vmatpush1.msra.mxu0 0.0
        %768 = vmatprep.subr.mxu0 0.0
        %769 = vmatpush1.msra.mxu0 0.0
        %770 = vmatprep.subr.mxu0 0.0
        %771 = vmatpush1.msra.mxu0 0.0
        %772 = vmatprep.subr.mxu0 0.0
        %773 = vmatpush1.msra.mxu0 0.0
        %774 = vmatprep.subr.mxu0 0.0
        %775 = vmatpush1.msra.mxu0 0.0
        %776 = vmatprep.subr.mxu0 0.0
        %777 = vmatpush1.msra.mxu0 0.0
        %778 = vmatprep.subr.mxu0 0.0
        %779 = vmatpush1.msra.mxu0 0.0
        %780 = vmatprep.subr.mxu0 0.0
        %781 = vmatpush1.msra.mxu0 0.0
        %782 = vmatprep.subr.mxu0 0.0
        %783 = vmatpush1.msra.mxu0 0.0
        %784 = vmatprep.subr.mxu0 0.0
        %785 = vmatpush1.msra.mxu0 0.0
        %786 = vmatprep.subr.mxu0 %v754
        %787 = vmatpush1.msra.mxu0 %v751
        %788 = vmatprep.subr.mxu0 0.0
        %789 = vmatpush2.msra.mxu0 0.0
        %790 = vmatprep.subr.mxu0 0.0
        %791 = vmatpush2.msra.mxu0 0.0
        %792 = vmatprep.subr.mxu0 0.0
        %793 = vmatpush2.msra.mxu0 0.0
        %794 = vmatprep.subr.mxu0 0.0
        %795 = vmatpush2.msra.mxu0 0.0
        %796 = vmatprep.subr.mxu0 0.0
        %797 = vmatpush2.msra.mxu0 0.0
        %798 = vmatprep.subr.mxu0 0.0
        %799 = vmatpush2.msra.mxu0 0.0
        %800 = vmatprep.subr.mxu0 0.0
        %801 = vmatpush2.msra.mxu0 0.0
        %802 = vmatprep.subr.mxu0 0.0
        %803 = vmatpush2.msra.mxu0 0.0
        %804 = vmatprep.subr.mxu0 0.0
        %805 = vmatpush2.msra.mxu0 0.0
        %806 = vmatprep.subr.mxu0 0.0
        %807 = vmatpush2.msra.mxu0 0.0
        %808 = vmatprep.subr.mxu0 0.0
        %809 = vmatpush2.msra.mxu0 0.0
        %810 = vmatprep.subr.mxu0 0.0
        %811 = vmatpush2.msra.mxu0 0.0
        %812 = vmatprep.subr.mxu0 0.0
        %813 = vmatpush2.msra.mxu0 0.0
        %814 = vmatprep.subr.mxu0 0.0
        %815 = vmatpush2.msra.mxu0 0.0
        %816 = vmatprep.subr.mxu0 0.0
        %817 = vmatpush2.msra.mxu0 0.0
        %818 = vmatprep.subr.mxu0 0.0
        %819 = vmatpush2.msra.mxu0 0.0
        %820 = vmatprep.mubr.f32.mxu0 0.0
        %821 = vmatmul.mubr.f32.gmra.mxu0 %v748
        %v822 = vpop.f32.mrf.mxu0
        %v823 = vadd.f32 0.0, %v822
        %v824 = vpop.f32.mrf.mxu0
        %v825 = vadd.f32 0.0, %v824
        %826 = vdwg.mxu0
        %v827 = vadd.f32 %v727, %v823
        %v828 = vadd.f32 %v728, %v825
        %v829 = vld [vmem:[#allocation2 + $0x4] sm:$0xff]
        %v830 = vld [vmem:[#allocation2 + $0xc] sm:$0xf]
        %v833 = vcombine.high %v829, %v829
        %834 = vrot.lane.b32.xlu0 %v829, 113
        %v835 = vpop.permute.xlu0 %834
        %836 = vrot.lane.b32.xlu0 %v833, 113
        %v837 = vpop.permute.xlu0 %836
        %838 = vrot.lane.b32.xlu0 %v830, 113
        %v839 = vpop.permute.xlu0 %838
        %vm840 = vcmask 924672
        %v841 = vsel %vm840, %v835, %v837
        %v842 = vsel %vm840, %v837, %v839
        %v845 = vsel %vm255, %v841, 0.0
        %v846 = vsel %vm256, %v842, 0.0
        %v848 = vsel %vm282, %v248, 0
        %v851 = vsel %vm286, %v845, 0
        %v854 = vsel %vm286, %v846, 0
        %856 = vmatprep.subr.mxu0 0.0
        %857 = vmatpush1.msra.mxu0 0.0
        %858 = vmatprep.subr.mxu0 0.0
        %859 = vmatpush1.msra.mxu0 0.0
        %860 = vmatprep.subr.mxu0 0.0
        %861 = vmatpush1.msra.mxu0 0.0
        %862 = vmatprep.subr.mxu0 0.0
        %863 = vmatpush1.msra.mxu0 0.0
        %864 = vmatprep.subr.mxu0 0.0
        %865 = vmatpush1.msra.mxu0 0.0
        %866 = vmatprep.subr.mxu0 0.0
        %867 = vmatpush1.msra.mxu0 0.0
        %868 = vmatprep.subr.mxu0 0.0
        %869 = vmatpush1.msra.mxu0 0.0
        %870 = vmatprep.subr.mxu0 0.0
        %871 = vmatpush1.msra.mxu0 0.0
        %872 = vmatprep.subr.mxu0 0.0
        %873 = vmatpush1.msra.mxu0 0.0
        %874 = vmatprep.subr.mxu0 0.0
        %875 = vmatpush1.msra.mxu0 0.0
        %876 = vmatprep.subr.mxu0 0.0
        %877 = vmatpush1.msra.mxu0 0.0
        %878 = vmatprep.subr.mxu0 0.0
        %879 = vmatpush1.msra.mxu0 0.0
        %880 = vmatprep.subr.mxu0 0.0
        %881 = vmatpush1.msra.mxu0 0.0
        %882 = vmatprep.subr.mxu0 0.0
        %883 = vmatpush1.msra.mxu0 0.0
        %884 = vmatprep.subr.mxu0 0.0
        %885 = vmatpush1.msra.mxu0 0.0
        %886 = vmatprep.subr.mxu0 %v854
        %887 = vmatpush1.msra.mxu0 %v851
        %888 = vmatprep.subr.mxu0 0.0
        %889 = vmatpush2.msra.mxu0 0.0
        %890 = vmatprep.subr.mxu0 0.0
        %891 = vmatpush2.msra.mxu0 0.0
        %892 = vmatprep.subr.mxu0 0.0
        %893 = vmatpush2.msra.mxu0 0.0
        %894 = vmatprep.subr.mxu0 0.0
        %895 = vmatpush2.msra.mxu0 0.0
        %896 = vmatprep.subr.mxu0 0.0
        %897 = vmatpush2.msra.mxu0 0.0
        %898 = vmatprep.subr.mxu0 0.0
        %899 = vmatpush2.msra.mxu0 0.0
        %900 = vmatprep.subr.mxu0 0.0
        %901 = vmatpush2.msra.mxu0 0.0
        %902 = vmatprep.subr.mxu0 0.0
        %903 = vmatpush2.msra.mxu0 0.0
        %904 = vmatprep.subr.mxu0 0.0
        %905 = vmatpush2.msra.mxu0 0.0
        %906 = vmatprep.subr.mxu0 0.0
        %907 = vmatpush2.msra.mxu0 0.0
        %908 = vmatprep.subr.mxu0 0.0
        %909 = vmatpush2.msra.mxu0 0.0
        %910 = vmatprep.subr.mxu0 0.0
        %911 = vmatpush2.msra.mxu0 0.0
        %912 = vmatprep.subr.mxu0 0.0
        %913 = vmatpush2.msra.mxu0 0.0
        %914 = vmatprep.subr.mxu0 0.0
        %915 = vmatpush2.msra.mxu0 0.0
        %916 = vmatprep.subr.mxu0 0.0
        %917 = vmatpush2.msra.mxu0 0.0
        %918 = vmatprep.subr.mxu0 0.0
        %919 = vmatpush2.msra.mxu0 0.0
        %920 = vmatprep.mubr.f32.mxu0 0.0
        %921 = vmatmul.mubr.f32.gmra.mxu0 %v848
        %v922 = vpop.f32.mrf.mxu0
        %v923 = vadd.f32 0.0, %v922
        %v924 = vpop.f32.mrf.mxu0
        %v925 = vadd.f32 0.0, %v924
        %926 = vdwg.mxu0
        %v927 = vadd.f32 %v827, %v923
        %v928 = vadd.f32 %v828, %v925
        %v929 = vld [vmem:[#allocation2 + $0x4] sm:$0xff]
        %v930 = vld [vmem:[#allocation2 + $0xc] sm:$0xf]
        %v933 = vcombine.high %v929, %v929
        %934 = vrot.lane.b32.xlu0 %v929, 112
        %v935 = vpop.permute.xlu0 %934
        %936 = vrot.lane.b32.xlu0 %v933, 112
        %v937 = vpop.permute.xlu0 %936
        %938 = vrot.lane.b32.xlu0 %v930, 112
        %v939 = vpop.permute.xlu0 %938
        %vm940 = vcmask 916480
        %v941 = vsel %vm940, %v935, %v937
        %v942 = vsel %vm940, %v937, %v939
        %v944 = vsel %vm282, %v249, 0
        %v946 = vsel %vm286, %v941, 0
        %v948 = vsel %vm286, %v942, 0
        %950 = vmatprep.subr.mxu0 0.0
        %951 = vmatpush1.msra.mxu0 0.0
        %952 = vmatprep.subr.mxu0 0.0
        %953 = vmatpush1.msra.mxu0 0.0
        %954 = vmatprep.subr.mxu0 0.0
        %955 = vmatpush1.msra.mxu0 0.0
        %956 = vmatprep.subr.mxu0 0.0
        %957 = vmatpush1.msra.mxu0 0.0
        %958 = vmatprep.subr.mxu0 0.0
        %959 = vmatpush1.msra.mxu0 0.0
        %960 = vmatprep.subr.mxu0 0.0
        %961 = vmatpush1.msra.mxu0 0.0
        %962 = vmatprep.subr.mxu0 0.0
        %963 = vmatpush1.msra.mxu0 0.0
        %964 = vmatprep.subr.mxu0 0.0
        %965 = vmatpush1.msra.mxu0 0.0
        %966 = vmatprep.subr.mxu0 0.0
        %967 = vmatpush1.msra.mxu0 0.0
        %968 = vmatprep.subr.mxu0 0.0
        %969 = vmatpush1.msra.mxu0 0.0
        %970 = vmatprep.subr.mxu0 0.0
        %971 = vmatpush1.msra.mxu0 0.0
        %972 = vmatprep.subr.mxu0 0.0
        %973 = vmatpush1.msra.mxu0 0.0
        %974 = vmatprep.subr.mxu0 0.0
        %975 = vmatpush1.msra.mxu0 0.0
        %976 = vmatprep.subr.mxu0 0.0
        %977 = vmatpush1.msra.mxu0 0.0
        %978 = vmatprep.subr.mxu0 0.0
        %979 = vmatpush1.msra.mxu0 0.0
        %980 = vmatprep.subr.mxu0 %v948
        %981 = vmatpush1.msra.mxu0 %v946
        %982 = vmatprep.subr.mxu0 0.0
        %983 = vmatpush2.msra.mxu0 0.0
        %984 = vmatprep.subr.mxu0 0.0
        %985 = vmatpush2.msra.mxu0 0.0
        %986 = vmatprep.subr.mxu0 0.0
        %987 = vmatpush2.msra.mxu0 0.0
        %988 = vmatprep.subr.mxu0 0.0
        %989 = vmatpush2.msra.mxu0 0.0
        %990 = vmatprep.subr.mxu0 0.0
        %991 = vmatpush2.msra.mxu0 0.0
        %992 = vmatprep.subr.mxu0 0.0
        %993 = vmatpush2.msra.mxu0 0.0
        %994 = vmatprep.subr.mxu0 0.0
        %995 = vmatpush2.msra.mxu0 0.0
        %996 = vmatprep.subr.mxu0 0.0
        %997 = vmatpush2.msra.mxu0 0.0
        %998 = vmatprep.subr.mxu0 0.0
        %999 = vmatpush2.msra.mxu0 0.0
        %1000 = vmatprep.subr.mxu0 0.0
        %1001 = vmatpush2.msra.mxu0 0.0
        %1002 = vmatprep.subr.mxu0 0.0
        %1003 = vmatpush2.msra.mxu0 0.0
        %1004 = vmatprep.subr.mxu0 0.0
        %1005 = vmatpush2.msra.mxu0 0.0
        %1006 = vmatprep.subr.mxu0 0.0
        %1007 = vmatpush2.msra.mxu0 0.0
        %1008 = vmatprep.subr.mxu0 0.0
        %1009 = vmatpush2.msra.mxu0 0.0
        %1010 = vmatprep.subr.mxu0 0.0
        %1011 = vmatpush2.msra.mxu0 0.0
        %1012 = vmatprep.subr.mxu0 0.0
        %1013 = vmatpush2.msra.mxu0 0.0
        %1014 = vmatprep.mubr.f32.mxu0 0.0
        %1015 = vmatmul.mubr.f32.gmra.mxu0 %v944
        %v1016 = vpop.f32.mrf.mxu0
        %v1017 = vadd.f32 0.0, %v1016
        %v1018 = vpop.f32.mrf.mxu0
        %v1019 = vadd.f32 0.0, %v1018
        %1020 = vdwg.mxu0
        %v1021 = vadd.f32 %v927, %v1017
        %v1022 = vadd.f32 %v928, %v1019
        %v1023 = vld [vmem:[#allocation2 + $0x4] sm:$0xff]
        %v1024 = vld [vmem:[#allocation2 + $0xc] sm:$0xf]
        %v1027 = vcombine.high %v1023, %v1023
        %1028 = vrot.lane.b32.xlu0 %v1023, 111
        %v1029 = vpop.permute.xlu0 %1028
        %1030 = vrot.lane.b32.xlu0 %v1027, 111
        %v1031 = vpop.permute.xlu0 %1030
        %1032 = vrot.lane.b32.xlu0 %v1024, 111
        %v1033 = vpop.permute.xlu0 %1032
        %vm1034 = vcmask 908288
        %v1035 = vsel %vm1034, %v1029, %v1031
        %v1036 = vsel %vm1034, %v1031, %v1033
        %v1039 = vsel %vm446, %v1035, 0.0
        %v1040 = vsel %vm447, %v1036, 0.0
        %v1042 = vsel %vm282, %v250, 0
        %v1045 = vsel %vm286, %v1039, 0
        %v1048 = vsel %vm286, %v1040, 0
        %1050 = vmatprep.subr.mxu0 0.0
        %1051 = vmatpush1.msra.mxu0 0.0
        %1052 = vmatprep.subr.mxu0 0.0
        %1053 = vmatpush1.msra.mxu0 0.0
        %1054 = vmatprep.subr.mxu0 0.0
        %1055 = vmatpush1.msra.mxu0 0.0
        %1056 = vmatprep.subr.mxu0 0.0
        %1057 = vmatpush1.msra.mxu0 0.0
        %1058 = vmatprep.subr.mxu0 0.0
        %1059 = vmatpush1.msra.mxu0 0.0
        %1060 = vmatprep.subr.mxu0 0.0
        %1061 = vmatpush1.msra.mxu0 0.0
        %1062 = vmatprep.subr.mxu0 0.0
        %1063 = vmatpush1.msra.mxu0 0.0
        %1064 = vmatprep.subr.mxu0 0.0
        %1065 = vmatpush1.msra.mxu0 0.0
        %1066 = vmatprep.subr.mxu0 0.0
        %1067 = vmatpush1.msra.mxu0 0.0
        %1068 = vmatprep.subr.mxu0 0.0
        %1069 = vmatpush1.msra.mxu0 0.0
        %1070 = vmatprep.subr.mxu0 0.0
        %1071 = vmatpush1.msra.mxu0 0.0
        %1072 = vmatprep.subr.mxu0 0.0
        %1073 = vmatpush1.msra.mxu0 0.0
        %1074 = vmatprep.subr.mxu0 0.0
        %1075 = vmatpush1.msra.mxu0 0.0
        %1076 = vmatprep.subr.mxu0 0.0
        %1077 = vmatpush1.msra.mxu0 0.0
        %1078 = vmatprep.subr.mxu0 0.0
        %1079 = vmatpush1.msra.mxu0 0.0
        %1080 = vmatprep.subr.mxu0 %v1048
        %1081 = vmatpush1.msra.mxu0 %v1045
        %1082 = vmatprep.subr.mxu0 0.0
        %1083 = vmatpush2.msra.mxu0 0.0
        %1084 = vmatprep.subr.mxu0 0.0
        %1085 = vmatpush2.msra.mxu0 0.0
        %1086 = vmatprep.subr.mxu0 0.0
        %1087 = vmatpush2.msra.mxu0 0.0
        %1088 = vmatprep.subr.mxu0 0.0
        %1089 = vmatpush2.msra.mxu0 0.0
        %1090 = vmatprep.subr.mxu0 0.0
        %1091 = vmatpush2.msra.mxu0 0.0
        %1092 = vmatprep.subr.mxu0 0.0
        %1093 = vmatpush2.msra.mxu0 0.0
        %1094 = vmatprep.subr.mxu0 0.0
        %1095 = vmatpush2.msra.mxu0 0.0
        %1096 = vmatprep.subr.mxu0 0.0
        %1097 = vmatpush2.msra.mxu0 0.0
        %1098 = vmatprep.subr.mxu0 0.0
        %1099 = vmatpush2.msra.mxu0 0.0
        %1100 = vmatprep.subr.mxu0 0.0
        %1101 = vmatpush2.msra.mxu0 0.0
        %1102 = vmatprep.subr.mxu0 0.0
        %1103 = vmatpush2.msra.mxu0 0.0
        %1104 = vmatprep.subr.mxu0 0.0
        %1105 = vmatpush2.msra.mxu0 0.0
        %1106 = vmatprep.subr.mxu0 0.0
        %1107 = vmatpush2.msra.mxu0 0.0
        %1108 = vmatprep.subr.mxu0 0.0
        %1109 = vmatpush2.msra.mxu0 0.0
        %1110 = vmatprep.subr.mxu0 0.0
        %1111 = vmatpush2.msra.mxu0 0.0
        %1112 = vmatprep.subr.mxu0 0.0
        %1113 = vmatpush2.msra.mxu0 0.0
        %1114 = vmatprep.mubr.f32.mxu0 0.0
        %1115 = vmatmul.mubr.f32.gmra.mxu0 %v1042
        %v1116 = vpop.f32.mrf.mxu0
        %v1117 = vadd.f32 0.0, %v1116
        %v1118 = vpop.f32.mrf.mxu0
        %v1119 = vadd.f32 0.0, %v1118
        %1120 = vdwg.mxu0
        %v1121 = vadd.f32 %v1021, %v1117
        %v1122 = vadd.f32 %v1022, %v1119
        %1123 = vst [vmem:[%s174] sm:$0xff] %v1121
        %1124 = vst [vmem:[%s174 + $0x8] sm:$0xff] %v1122
        %s1125 = sand.u32 %s98, 1
        %s1126 = scalar_lea.sflag [#allocation4], %s1125
        %s1127 = sand.u32 %s98, 1
        %s1128 = smul.addr %s1127, 16
        %s1129 = scalar_lea.vmem [#allocation3], %s1128
        // Predicated region
        $region33: #{tpu_custom_call.1} parent=31 // pred_check
          %p1130 = pneg %p108
        $region34: #{tpu_custom_call.1} parent=31 // pred_check_branch
          %1132 = sbr.rel (%p1130) target = $region36
        $region35: #{tpu_custom_call.1} parent=31 // pred_region
          %s1134 = ssub.s32 256, 256
          %1135 = vsyncadd %s1126, %s1134
          %s1136 = smul.addr %s17, 2
          %s1137 = smul.addr %s1136, 128
          %s1138 = scalar_lea.hbm %s3, %s1137
          %s1140 = sshll.u32 %s1129, 4
          %s1141 = int_to_ptr.vmem [resolvable:$true] %s1140
          %1143 = dma.vmem_to_hbm [thread:$0]  %s1141, 256, %s1138, %s1126
        $region36: #{tpu_custom_call.1} parent=31 // pred_fallthru
          _
      $region32: #{tpu_custom_call.1} parent=5 // pred_fallthru
        _
      %p1144 = scmp.le.s32.totalorder 2, %s12
      // Predicated region
      $region37: #{tpu_custom_call.1} parent=5 // pred_check
        %p1145 = pneg %p1144
      $region38: #{tpu_custom_call.1} parent=5 // pred_check_branch
        %1147 = sbr.rel (%p1145) target = $region40
      $region39: #{tpu_custom_call.1} parent=5 // pred_region
        %s1148 = ssub.s32 %s12, 2
        // Predicated region
        $region41: #{tpu_custom_call.1} parent=39 // pred_check
          %p1149 = pneg %p114
        $region42: #{tpu_custom_call.1} parent=39 // pred_check_branch
          %1151 = sbr.rel (%p1149) target = $region44
        $region43: #{tpu_custom_call.1} parent=39 // pred_region
          %s1152 = sand.u32 %s99, 1
          %s1153 = scalar_lea.sflag [#allocation4], %s1152
          %s1154 = sand.u32 %s99, 1
          %s1155 = smul.addr %s1154, 16
          %s1156 = scalar_lea.vmem [#allocation3], %s1155
          %1157 = dma.done %s1153, 256
        $region44: #{tpu_custom_call.1} parent=39 // pred_fallthru
          _
      $region40: #{tpu_custom_call.1} parent=5 // pred_fallthru
        _
    $region6: #{tpu_custom_call.1} parent=1 // loop_footer
      %s16 = sadd.s32 1, %s12
    $region7: #{tpu_custom_call.1} parent=1 // loop_footer_branch
      %11 = sbr.rel target = $region3
    $region8: #{tpu_custom_call.1} parent=1 // loop_exit
      _
    %1158 = vsyncpa [#allocation4], 1
    %s1159 = scalar_lea.sflag [#allocation4], 1
    %1160 = vsyncpa %s1159, 1

</llo_original>
